<compile_context>
chip_gen: v7x
topology: tpu7x:2x2x1
jax: 0.10.0
libtpu: 0.0.40
codegen_flags: <defaults>
</compile_context>

<pallas_src>
import math

import jax
import jax.numpy as jnp
from jax.experimental import pallas as pl
from jax.experimental.pallas import tpu as pltpu


def _se_kernel(x_ref, w1_ref, b1_ref, w2_ref, b2_ref, o_ref):
    x = x_ref[...]                                                    # (tile_r, W)
    # linear_1 + ReLU   (MXU matmul, f32 accumulate)
    h = jnp.dot(x, w1_ref[...], preferred_element_type=jnp.float32) + b1_ref[...]
    h = jnp.maximum(h, 0.0)
    # linear_2 + sigmoid
    s = jnp.dot(h, w2_ref[...], preferred_element_type=jnp.float32) + b2_ref[...]
    g = jax.nn.sigmoid(s)                                             # (tile_r, W)
    # gate the original input
    o_ref[...] = (x.astype(jnp.float32) * g).astype(o_ref.dtype)


def make_se_block(w1, b1, w2, b2, *,
                  target_tile_bytes=2 * 1024 * 1024,
                  vmem_limit_bytes=48 * 1024 * 1024):
    """w1: (C//r, C), b1: (C//r,), w2: (C, C//r), b2: (C,) (PyTorch Linear layout).

    Returns a jitted callable x -> SE(x) for x of shape (..., C).
    """
    Hd, C = w1.shape
    assert w2.shape == (C, Hd) and b1.shape == (Hd,) and b2.shape == (C,)

    # ---- one-time parameter prep (hoisted out of the per-call path) --------
    pack = 128 // C if (C < 128 and 128 % C == 0) else 1
    w1_t = jnp.transpose(w1)                                          # (C, Hd)
    w2_t = jnp.transpose(w2)                                          # (Hd, C)
    if pack > 1:
        # Block-diagonal replication: each group of C lanes in a packed row is
        # an independent original row and only sees its own copy of W1/W2.
        eye = jnp.eye(pack, dtype=w1.dtype)
        w1_t = jnp.kron(eye, w1_t)                                    # (pack*C, pack*Hd)
        w2_t = jnp.kron(eye, w2_t)                                    # (pack*Hd, pack*C)
        b1_p = jnp.tile(b1, pack)
        b2_p = jnp.tile(b2, pack)
    else:
        b1_p, b2_p = b1, b2
    W = pack * C                                                      # packed lane width
    Hp = pack * Hd
    b1_2d = b1_p.reshape(1, Hp)
    b2_2d = b2_p.reshape(1, W)

    def apply(x, w1_bd, b1_bd, w2_bd, b2_bd):
        orig_shape = x.shape
        rows = math.prod(orig_shape[:-1]) if x.ndim > 1 else 1
        x2d = x.reshape(rows, C)

        # pack `pack` consecutive rows into one lane-dense row of width W
        pad = (-rows) % pack
        if pad:
            x2d = jnp.pad(x2d, ((0, pad), (0, 0)))
        prows = (rows + pad) // pack
        xp = x2d.reshape(prows, W)

        # largest row tile (multiple of 8) within the per-buffer byte budget
        itemsize = jnp.dtype(x.dtype).itemsize
        tile_r = max(8, (target_tile_bytes // (W * itemsize)) // 8 * 8)
        if tile_r >= prows:
            tile_r = prows                                            # single full block
        grid = (pl.cdiv(prows, tile_r),)

        out = pl.pallas_call(
            _se_kernel,
            out_shape=jax.ShapeDtypeStruct((prows, W), x.dtype),
            grid_spec=pltpu.PrefetchScalarGridSpec(
                num_scalar_prefetch=0,
                grid=grid,
                in_specs=[
                    pl.BlockSpec((tile_r, W), lambda i: (i, 0)),      # x: pipelined
                    pl.BlockSpec((W, Hp), lambda i: (0, 0)),          # weights stay resident
                    pl.BlockSpec((1, Hp), lambda i: (0, 0)),
                    pl.BlockSpec((Hp, W), lambda i: (0, 0)),
                    pl.BlockSpec((1, W), lambda i: (0, 0)),
                ],
                out_specs=pl.BlockSpec((tile_r, W), lambda i: (i, 0)),
            ),
            compiler_params=pltpu.CompilerParams(
                dimension_semantics=("parallel",),   # row tiles are fully independent
                vmem_limit_bytes=vmem_limit_bytes,
            ),
        )(xp, w1_bd, b1_bd, w2_bd, b2_bd)

        out = out.reshape(prows * pack, C)
        if pad:
            out = out[:rows]
        return out.reshape(orig_shape)

    apply_jit = jax.jit(apply)
    return lambda x: apply_jit(x, w1_t, b1_2d, w2_t, b2_2d)


if __name__ == "__main__":
    key = jax.random.PRNGKey(0)
    k_x, k_x2, k_w1, k_b1, k_w2, k_b2 = jax.random.split(key, 6)

    B, S, C, R = 2, 16, 32, 8            # in_ch=32, r=8 -> hidden=4
    Hd = C // R

    x = jax.random.normal(k_x, (B, S, C), dtype=jnp.float32)
    # PyTorch Linear layout: (out_features, in_features)
    w1 = jax.random.normal(k_w1, (Hd, C), dtype=jnp.float32) * 0.1
    b1 = jax.random.normal(k_b1, (Hd,), dtype=jnp.float32) * 0.1
    w2 = jax.random.normal(k_w2, (C, Hd), dtype=jnp.float32) * 0.1
    b2 = jax.random.normal(k_b2, (C,), dtype=jnp.float32) * 0.1

    se = make_se_block(w1, b1, w2, b2)

    def ref_fn(xv):
        hp = jax.lax.Precision.HIGHEST
        h = jnp.maximum(jnp.dot(xv, w1.T, precision=hp) + b1, 0.0)
        g = jax.nn.sigmoid(jnp.dot(h, w2.T, precision=hp) + b2)
        return xv * g

    out = se(x)
    jax.block_until_ready(out)
    assert out.shape == x.shape
    assert jnp.allclose(out, ref_fn(x), atol=2e-5, rtol=2e-5), "mismatch vs reference"

    # odd row count exercises the pad/unpad path of the lane-dense packing
    x_odd = jax.random.normal(k_x2, (3, 5, C), dtype=jnp.float32)
    out_odd = se(x_odd)
    jax.block_until_ready(out_odd)
    assert jnp.allclose(out_odd, ref_fn(x_odd), atol=2e-5, rtol=2e-5), "mismatch (odd rows)"

    print("KERNEL_OK")
</pallas_src>

<mosaic_0001>
module attributes {stable_mosaic.version = 11 : i64} {
  func.func @_se_kernel(%arg0: i32, %arg1: memref<8x128xf32, #tpu.memory_space<vmem>>, %arg2: memref<128x16xf32, #tpu.memory_space<vmem>>, %arg3: memref<1x16xf32, #tpu.memory_space<vmem>>, %arg4: memref<16x128xf32, #tpu.memory_space<vmem>>, %arg5: memref<1x128xf32, #tpu.memory_space<vmem>>, %arg6: memref<8x128xf32, #tpu.memory_space<vmem>>) attributes {dimension_semantics = [#tpu.dimension_semantics<parallel>], iteration_bounds = array<i64: 1>, scalar_prefetch = 0 : i64, scratch_operands = 0 : i64, tpu.core_type = #tpu.core_type<tc>, window_params = [{transform_indices = @transform_0, window_bounds = array<i64: 8, 128>}, {pipeline_mode = #tpu.pipeline_mode<synchronous>, transform_indices = @transform_1, window_bounds = array<i64: 128, 16>}, {pipeline_mode = #tpu.pipeline_mode<synchronous>, transform_indices = @transform_2, window_bounds = array<i64: 1, 16>}, {pipeline_mode = #tpu.pipeline_mode<synchronous>, transform_indices = @transform_3, window_bounds = array<i64: 16, 128>}, {pipeline_mode = #tpu.pipeline_mode<synchronous>, transform_indices = @transform_4, window_bounds = array<i64: 1, 128>}, {transform_indices = @transform_5, window_bounds = array<i64: 8, 128>}]} {
    %c0 = arith.constant 0 : index
    %c0_0 = arith.constant 0 : index
    %0 = vector.load %arg1[%c0, %c0_0] : memref<8x128xf32, #tpu.memory_space<vmem>>, vector<8x128xf32>
    %c0_1 = arith.constant 0 : index
    %c0_2 = arith.constant 0 : index
    %1 = vector.load %arg2[%c0_1, %c0_2] : memref<128x16xf32, #tpu.memory_space<vmem>>, vector<128x16xf32>
    %cst = arith.constant dense<0.000000e+00> : vector<8x16xf32>
    %2 = tpu.matmul %0, %1, %cst {dimension_numbers = #tpu.dot_dimension_numbers<[1], [0], [0], [1], [0, 0, 1, 1], [], []>} : vector<8x128xf32>, vector<128x16xf32>, vector<8x16xf32> -> vector<8x16xf32>
    %c0_3 = arith.constant 0 : index
    %c0_4 = arith.constant 0 : index
    %3 = vector.load %arg3[%c0_3, %c0_4] : memref<1x16xf32, #tpu.memory_space<vmem>>, vector<1x16xf32>
    %4 = vector.broadcast %3 : vector<1x16xf32> to vector<8x16xf32>
    %5 = arith.addf %2, %4 : vector<8x16xf32>
    %cst_5 = arith.constant 0.000000e+00 : f32
    %6 = vector.broadcast %cst_5 : f32 to vector<8x16xf32>
    %7 = arith.maximumf %5, %6 : vector<8x16xf32>
    %c0_6 = arith.constant 0 : index
    %c0_7 = arith.constant 0 : index
    %8 = vector.load %arg4[%c0_6, %c0_7] : memref<16x128xf32, #tpu.memory_space<vmem>>, vector<16x128xf32>
    %cst_8 = arith.constant dense<0.000000e+00> : vector<8x128xf32>
    %9 = tpu.matmul %7, %8, %cst_8 {dimension_numbers = #tpu.dot_dimension_numbers<[1], [0], [0], [1], [0, 0, 1, 1], [], []>} : vector<8x16xf32>, vector<16x128xf32>, vector<8x128xf32> -> vector<8x128xf32>
    %c0_9 = arith.constant 0 : index
    %c0_10 = arith.constant 0 : index
    %10 = vector.load %arg5[%c0_9, %c0_10] : memref<1x128xf32, #tpu.memory_space<vmem>>, vector<1x128xf32>
    %11 = vector.broadcast %10 : vector<1x128xf32> to vector<8x128xf32>
    %12 = arith.addf %9, %11 : vector<8x128xf32>
    %13 = arith.negf %12 : vector<8x128xf32>
    %14 = math.exp %13 : vector<8x128xf32>
    %cst_11 = arith.constant 1.000000e+00 : f32
    %15 = vector.broadcast %cst_11 : f32 to vector<8x128xf32>
    %16 = arith.addf %15, %14 : vector<8x128xf32>
    %17 = arith.divf %15, %16 : vector<8x128xf32>
    %18 = arith.mulf %0, %17 : vector<8x128xf32>
    %c0_12 = arith.constant 0 : index
    %c0_13 = arith.constant 0 : index
    %19 = vector.load %arg6[%c0_12, %c0_13] : memref<8x128xf32, #tpu.memory_space<vmem>>, vector<8x128xf32>
    tpu.vector_store %arg6[%c0_12, %c0_13], %18 {strides = array<i32>} : memref<8x128xf32, #tpu.memory_space<vmem>>, vector<8x128xf32>,
    return
  }
  func.func @transform_0(%arg0: i32) -> (i32, i32) {
    %c0_i32 = arith.constant 0 : i32
    %c0_i32_0 = arith.constant 0 : i32
    return %arg0, %c0_i32 : i32, i32
  }
  func.func @transform_1(%arg0: i32) -> (i32, i32) {
    %c0_i32 = arith.constant 0 : i32
    %c0_i32_0 = arith.constant 0 : i32
    %c0_i32_1 = arith.constant 0 : i32
    return %c0_i32, %c0_i32_0 : i32, i32
  }
  func.func @transform_2(%arg0: i32) -> (i32, i32) {
    %c0_i32 = arith.constant 0 : i32
    %c0_i32_0 = arith.constant 0 : i32
    %c0_i32_1 = arith.constant 0 : i32
    return %c0_i32, %c0_i32_0 : i32, i32
  }
  func.func @transform_3(%arg0: i32) -> (i32, i32) {
    %c0_i32 = arith.constant 0 : i32
    %c0_i32_0 = arith.constant 0 : i32
    %c0_i32_1 = arith.constant 0 : i32
    return %c0_i32, %c0_i32_0 : i32, i32
  }
  func.func @transform_4(%arg0: i32) -> (i32, i32) {
    %c0_i32 = arith.constant 0 : i32
    %c0_i32_0 = arith.constant 0 : i32
    %c0_i32_1 = arith.constant 0 : i32
    return %c0_i32, %c0_i32_0 : i32, i32
  }
  func.func @transform_5(%arg0: i32) -> (i32, i32) {
    %c0_i32 = arith.constant 0 : i32
    %c0_i32_0 = arith.constant 0 : i32
    return %arg0, %c0_i32 : i32, i32
  }
}

</mosaic_0001>

<llo_original>
// kernel: apply.1
$region0: #{apply.1}
  #allocation0 [shape = 'u32[]', space=smem, size = 0x4, offset = 0x4, fixed_abs, tag = 'smem constant byte address 0x4 - core index']
  #allocation1 [shape = 'u32[144,128]{1,0:T(1,128)}', space=vmem, size = 0x12000, scoped, tag = 'internal scratch']
  %s0 = inlined_call_operand.vmem [shape: f32[8,128], index: 0, kind: input, shape index: {}]
  %s1 = inlined_call_operand.vmem [shape: f32[128,16], index: 1, kind: input, shape index: {}]
  %s2 = inlined_call_operand.vmem [shape: f32[1,16], index: 2, kind: input, shape index: {}]
  %s3 = inlined_call_operand.vmem [shape: f32[16,128], index: 3, kind: input, shape index: {}]
  %s4 = inlined_call_operand.vmem [shape: f32[1,128], index: 4, kind: input, shape index: {}]
  %s5 = inlined_call_operand.vmem [shape: f32[8,128], index: 5, kind: output, shape index: {}]
  %s6 = sld [smem:[#allocation0]]
  $region30: #{apply.1} parent=0
    _
  %s8 = ssub.s32 1, %s6
  %s9 = scalar_select 0, %s8, %s6
  // Predicated region
  $region2: #{apply.1} parent=0 // pred_check
    _
  $region3: #{apply.1} parent=0 // pred_check_branch
    %11 = sbr.rel (0) target = $region5
  $region4: #{apply.1} parent=0 // pred_region
    _
  $region5: #{apply.1} parent=0 // pred_fallthru
    _
  // Predicated region
  $region6: #{apply.1} parent=0 // pred_check
    _
  $region7: #{apply.1} parent=0 // pred_check_branch
    %13 = sbr.rel (0) target = $region9
  $region8: #{apply.1} parent=0 // pred_region
    _
  $region9: #{apply.1} parent=0 // pred_fallthru
    _
  // Predicated region
  $region10: #{apply.1} parent=0 // pred_check
    _
  $region11: #{apply.1} parent=0 // pred_check_branch
    %15 = sbr.rel (0) target = $region13
  $region12: #{apply.1} parent=0 // pred_region
    _
  $region13: #{apply.1} parent=0 // pred_fallthru
    _
  // Predicated region
  $region14: #{apply.1} parent=0 // pred_check
    _
  $region15: #{apply.1} parent=0 // pred_check_branch
    %17 = sbr.rel (0) target = $region17
  $region16: #{apply.1} parent=0 // pred_region
    _
  $region17: #{apply.1} parent=0 // pred_fallthru
    _
  // Predicated region
  $region18: #{apply.1} parent=0 // pred_check
    _
  $region19: #{apply.1} parent=0 // pred_check_branch
    %19 = sbr.rel (0) target = $region21
  $region20: #{apply.1} parent=0 // pred_region
    _
  $region21: #{apply.1} parent=0 // pred_fallthru
    _
  %v20 = vld [vmem:[%s0] sm:$0xff]
  %v21 = vld [vmem:[%s1] sm:$0xff]
  %v22 = vld [vmem:[%s1 + $0x8] sm:$0xff]
  %v23 = vld [vmem:[%s1 + $0x10] sm:$0xff]
  %v24 = vld [vmem:[%s1 + $0x18] sm:$0xff]
  %v25 = vld [vmem:[%s1 + $0x20] sm:$0xff]
  %v26 = vld [vmem:[%s1 + $0x28] sm:$0xff]
  %v27 = vld [vmem:[%s1 + $0x30] sm:$0xff]
  %v28 = vld [vmem:[%s1 + $0x38] sm:$0xff]
  %v29 = vld [vmem:[%s1 + $0x40] sm:$0xff]
  %v30 = vld [vmem:[%s1 + $0x48] sm:$0xff]
  %v31 = vld [vmem:[%s1 + $0x50] sm:$0xff]
  %v32 = vld [vmem:[%s1 + $0x58] sm:$0xff]
  %v33 = vld [vmem:[%s1 + $0x60] sm:$0xff]
  %v34 = vld [vmem:[%s1 + $0x68] sm:$0xff]
  %v35 = vld [vmem:[%s1 + $0x70] sm:$0xff]
  %v36 = vld [vmem:[%s1 + $0x78] sm:$0xff]
  %v37 = vld [vmem:[%s2] sm:$0x1]
  %v39 = vlaneseq
  %v40 = vshrl.u32 %v39, 7
  %v41 = vsub.s32 0, %v40
  %v42 = vrot.slane %v37, %v41
  %44 = vmatprep.subr.mxu0 0.0
  %45 = vmatpush1.msra.mxu0 %v21
  %46 = vmatprep.subr.mxu0 0.0
  %47 = vmatpush1.msra.mxu0 %v22
  %48 = vmatprep.subr.mxu0 0.0
  %49 = vmatpush1.msra.mxu0 %v23
  %50 = vmatprep.subr.mxu0 0.0
  %51 = vmatpush1.msra.mxu0 %v24
  %52 = vmatprep.subr.mxu0 0.0
  %53 = vmatpush1.msra.mxu0 %v25
  %54 = vmatprep.subr.mxu0 0.0
  %55 = vmatpush1.msra.mxu0 %v26
  %56 = vmatprep.subr.mxu0 0.0
  %57 = vmatpush1.msra.mxu0 %v27
  %58 = vmatprep.subr.mxu0 0.0
  %59 = vmatpush1.msra.mxu0 %v28
  %60 = vmatprep.subr.mxu0 0.0
  %61 = vmatpush1.msra.mxu0 %v29
  %62 = vmatprep.subr.mxu0 0.0
  %63 = vmatpush1.msra.mxu0 %v30
  %64 = vmatprep.subr.mxu0 0.0
  %65 = vmatpush1.msra.mxu0 %v31
  %66 = vmatprep.subr.mxu0 0.0
  %67 = vmatpush1.msra.mxu0 %v32
  %68 = vmatprep.subr.mxu0 0.0
  %69 = vmatpush1.msra.mxu0 %v33
  %70 = vmatprep.subr.mxu0 0.0
  %71 = vmatpush1.msra.mxu0 %v34
  %72 = vmatprep.subr.mxu0 0.0
  %73 = vmatpush1.msra.mxu0 %v35
  %74 = vmatprep.subr.mxu0 0.0
  %75 = vmatpush1.msra.mxu0 %v36
  %76 = vmatprep.subr.mxu0 0.0
  %77 = vmatpush1.msra.mxu0 0.0
  %78 = vmatprep.subr.mxu0 0.0
  %79 = vmatpush1.msra.mxu0 0.0
  %80 = vmatprep.subr.mxu0 0.0
  %81 = vmatpush1.msra.mxu0 0.0
  %82 = vmatprep.subr.mxu0 0.0
  %83 = vmatpush1.msra.mxu0 0.0
  %84 = vmatprep.subr.mxu0 0.0
  %85 = vmatpush1.msra.mxu0 0.0
  %86 = vmatprep.subr.mxu0 0.0
  %87 = vmatpush1.msra.mxu0 0.0
  %88 = vmatprep.subr.mxu0 0.0
  %89 = vmatpush1.msra.mxu0 0.0
  %90 = vmatprep.subr.mxu0 0.0
  %91 = vmatpush1.msra.mxu0 0.0
  %92 = vmatprep.subr.mxu0 0.0
  %93 = vmatpush1.msra.mxu0 0.0
  %94 = vmatprep.subr.mxu0 0.0
  %95 = vmatpush1.msra.mxu0 0.0
  %96 = vmatprep.subr.mxu0 0.0
  %97 = vmatpush1.msra.mxu0 0.0
  %98 = vmatprep.subr.mxu0 0.0
  %99 = vmatpush1.msra.mxu0 0.0
  %100 = vmatprep.subr.mxu0 0.0
  %101 = vmatpush1.msra.mxu0 0.0
  %102 = vmatprep.subr.mxu0 0.0
  %103 = vmatpush1.msra.mxu0 0.0
  %104 = vmatprep.subr.mxu0 0.0
  %105 = vmatpush1.msra.mxu0 0.0
  %106 = vmatprep.subr.mxu0 0.0
  %107 = vmatpush1.msra.mxu0 0.0
  %108 = vmatprep.mubr.f32.mxu0 0.0
  %109 = vmatmul.mubr.f32.gmra.mrb[0].mxu0 %v20
  %v110 = vpop.f32.mrb[0].mxu0
  %v111 = vadd.f32 %v42, %v110
  %v112 = vpop.f32.mrb[0].mxu0
  %113 = vdwg.mxu0
  %v114 = vmax.f32 %v111, 0.0
  %v115 = vld [vmem:[%s3] sm:$0xff]
  %v116 = vld [vmem:[%s3 + $0x8] sm:$0xff]
  %v117 = vld [vmem:[%s4] sm:$0x1]
  %v119 = vlaneseq
  %v120 = vshrl.u32 %v119, 7
  %v121 = vsub.s32 0, %v120
  %v122 = vrot.slane %v117, %v121
  %vm124 = vcmask 130048
  %v126 = vsel %vm124, %v114, 0
  %128 = vmatprep.subr.mxu0 0.0
  %129 = vmatpush1.msra.mxu0 %v115
  %130 = vmatprep.subr.mxu0 0.0
  %131 = vmatpush1.msra.mxu0 %v116
  %132 = vmatprep.subr.mxu0 0.0
  %133 = vmatpush1.msra.mxu0 0.0
  %134 = vmatprep.subr.mxu0 0.0
  %135 = vmatpush1.msra.mxu0 0.0
  %136 = vmatprep.subr.mxu0 0.0
  %137 = vmatpush1.msra.mxu0 0.0
  %138 = vmatprep.subr.mxu0 0.0
  %139 = vmatpush1.msra.mxu0 0.0
  %140 = vmatprep.subr.mxu0 0.0
  %141 = vmatpush1.msra.mxu0 0.0
  %142 = vmatprep.subr.mxu0 0.0
  %143 = vmatpush1.msra.mxu0 0.0
  %144 = vmatprep.subr.mxu0 0.0
  %145 = vmatpush1.msra.mxu0 0.0
  %146 = vmatprep.subr.mxu0 0.0
  %147 = vmatpush1.msra.mxu0 0.0
  %148 = vmatprep.subr.mxu0 0.0
  %149 = vmatpush1.msra.mxu0 0.0
  %150 = vmatprep.subr.mxu0 0.0
  %151 = vmatpush1.msra.mxu0 0.0
  %152 = vmatprep.subr.mxu0 0.0
  %153 = vmatpush1.msra.mxu0 0.0
  %154 = vmatprep.subr.mxu0 0.0
  %155 = vmatpush1.msra.mxu0 0.0
  %156 = vmatprep.subr.mxu0 0.0
  %157 = vmatpush1.msra.mxu0 0.0
  %158 = vmatprep.subr.mxu0 0.0
  %159 = vmatpush1.msra.mxu0 0.0
  %160 = vmatprep.subr.mxu0 0.0
  %161 = vmatpush1.msra.mxu0 0.0
  %162 = vmatprep.subr.mxu0 0.0
  %163 = vmatpush1.msra.mxu0 0.0
  %164 = vmatprep.subr.mxu0 0.0
  %165 = vmatpush1.msra.mxu0 0.0
  %166 = vmatprep.subr.mxu0 0.0
  %167 = vmatpush1.msra.mxu0 0.0
  %168 = vmatprep.subr.mxu0 0.0
  %169 = vmatpush1.msra.mxu0 0.0
  %170 = vmatprep.subr.mxu0 0.0
  %171 = vmatpush1.msra.mxu0 0.0
  %172 = vmatprep.subr.mxu0 0.0
  %173 = vmatpush1.msra.mxu0 0.0
  %174 = vmatprep.subr.mxu0 0.0
  %175 = vmatpush1.msra.mxu0 0.0
  %176 = vmatprep.subr.mxu0 0.0
  %177 = vmatpush1.msra.mxu0 0.0
  %178 = vmatprep.subr.mxu0 0.0
  %179 = vmatpush1.msra.mxu0 0.0
  %180 = vmatprep.subr.mxu0 0.0
  %181 = vmatpush1.msra.mxu0 0.0
  %182 = vmatprep.subr.mxu0 0.0
  %183 = vmatpush1.msra.mxu0 0.0
  %184 = vmatprep.subr.mxu0 0.0
  %185 = vmatpush1.msra.mxu0 0.0
  %186 = vmatprep.subr.mxu0 0.0
  %187 = vmatpush1.msra.mxu0 0.0
  %188 = vmatprep.subr.mxu0 0.0
  %189 = vmatpush1.msra.mxu0 0.0
  %190 = vmatprep.subr.mxu0 0.0
  %191 = vmatpush1.msra.mxu0 0.0
  %192 = vmatprep.mubr.f32.mxu0 0.0
  %193 = vmatmul.mubr.f32.gmra.mrb[0].mxu0 %v126
  %v194 = vpop.f32.mrb[0].mxu0
  %v195 = vadd.f32 %v122, %v194
  %v196 = vpop.f32.mrb[0].mxu0
  %197 = vdwg.mxu0
  %v198 = vxor.u32 %v195, 2147483648
  %v199 = vmul.f32 %v198, 1.442695
  %v200 = vpow.pop %v199
  %v201 = vadd.f32 %v200, 1.0
  %v202 = vrcp.pop %v201
  %v203 = vmul.f32 1.0, %v202
  %v204 = vmul.f32 %v20, %v203
  %205 = vst [vmem:[%s5] sm:$0xff] %v204
  // Predicated region
  $region22: #{apply.1} parent=0 // pred_check
    _
  $region23: #{apply.1} parent=0 // pred_check_branch
    %207 = sbr.rel (0) target = $region25
  $region24: #{apply.1} parent=0 // pred_region
    _
  $region25: #{apply.1} parent=0 // pred_fallthru
    _
  // Predicated region
  $region26: #{apply.1} parent=0 // pred_check
    _
  $region27: #{apply.1} parent=0 // pred_check_branch
    %209 = sbr.rel (0) target = $region29
  $region28: #{apply.1} parent=0 // pred_region
    _
  $region29: #{apply.1} parent=0 // pred_fallthru
    _

</llo_original>
